<compile_context>
chip_gen: v5e
topology: v5e:2x2
jax: 0.10.0
libtpu: 0.0.40
codegen_flags: <defaults>
</compile_context>

<pallas_src>
import jax
import jax.numpy as jnp
from jax import lax
from jax.experimental import pallas as pl
from jax.experimental.pallas import tpu as pltpu


def _round_up(a, m):
    return (a + m - 1) // m * m


def _make_fused_linear_kernel(n_fused, rank, approx_recip):
    """Build the kernel body.  Grid: (out_tiles,) — adapters handled in-body.

    active_ref : (n_fused,) i32 SMEM    per-adapter "has any active row" flag
    x_ref      : (B, in)                resident input block (constant index)
    w_ref      : (TN, in)               base-weight tile for this out-tile
    wmask_ref  : (n_fused, B, 1) f32    pre-masked top_k_weights columns
    inter_ref  : (n_fused, B, rank)     precomputed x @ qa[i].T (wrapper-side)
    qb_ref     : (n_fused, TN, rank)    up-projection tiles, all adapters
    out_ref    : (B, TN) f32            output tile (accumulated in-body)
    """

    def kernel(active_ref, x_ref, w_ref, wmask_ref, inter_ref, qb_ref, out_ref):
        # Base linear: (B,in) . (TN,in)^T  -> (B,TN), transpose-free on the MXU.
        base = lax.dot_general(x_ref[...], w_ref[...],
                               (((1,), (1,)), ((), ())),
                               preferred_element_type=jnp.float32)
        out_ref[...] = base
        base_sq = base * base

        for i in range(n_fused):            # static unroll; n_fused is small
            @pl.when(active_ref[i] != 0)
            def _adapter(i=i):
                w_col = wmask_ref[i]                       # (B,1) f32, pre-masked
                # LoRA up-projection: (B,rank) . (TN,rank)^T -> (B,TN)
                lora = lax.dot_general(inter_ref[i], qb_ref[i],
                                       (((1,), (1,)), ((), ())),
                                       preferred_element_type=jnp.float32)
                lora_w = lora * w_col                      # zero on inactive rows
                row_active = w_col != 0.0                  # (B,1) bool
                out_norm = jnp.sqrt(
                    jnp.sum(jnp.where(row_active, base_sq, 0.0),
                            axis=0, keepdims=True))
                lora_norm = jnp.sqrt(
                    jnp.sum(lora_w * lora_w, axis=0, keepdims=True)) + 1e-8
                if approx_recip:
                    # EUP reciprocal — only on the loose-tolerance bf16 path.
                    scale = (0.1 * out_norm) * pl.reciprocal(lora_norm,
                                                             approx=True)
                else:
                    scale = (0.1 * out_norm) / lora_norm   # exact, strict path
                # single read-modify-write of the resident output tile
                out_ref[...] = out_ref[...] + lora_w * scale

    return kernel


def fused_linear_forward(x, fused_weight, qa_weights, qb_weights,
                         top_k_weights, *, compute_dtype=jnp.bfloat16, tn=None):
    B, in_f = x.shape
    out_f, _ = fused_weight.shape
    n_fused, rank, _ = qa_weights.shape

    cdt = jnp.dtype(compute_dtype) if compute_dtype is not None else jnp.dtype(x.dtype)
    itemsize = cdt.itemsize

    # Lane-dense padding: features multiple of 128, batch multiple of 16.
    b_pad = _round_up(B, 16)
    in_pad = _round_up(in_f, 128)
    out_pad = _round_up(out_f, 128)

    # Generation-aware VMEM budget (v7x: 64 MiB/TC, v5e/v6e: 128 MiB).
    try:
        vmem_cap = int(pltpu.get_tpu_info().vmem_capacity_bytes)
    except Exception:
        vmem_cap = 64 * 1024 * 1024          # conservative (v7x per-TC) fallback
    budget = min(int(0.75 * vmem_cap), 100 * 1024 * 1024)

    def est_vmem(tn_):
        lane = lambda n: _round_up(n, 128)
        sub = lambda n: _round_up(n, 16)
        return (2 * sub(b_pad) * in_pad * itemsize                  # x (2 bufs)
                + 2 * sub(tn_) * in_pad * itemsize                  # W tile
                + 2 * n_fused * sub(b_pad) * lane(1) * 4            # wmask
                + 2 * n_fused * sub(b_pad) * lane(rank) * itemsize  # inter
                + 2 * n_fused * sub(tn_) * lane(rank) * itemsize    # qb tile
                + 2 * sub(b_pad) * tn_ * 4                          # out tile
                + 4 * sub(b_pad) * tn_ * 4)                         # body temps

    if tn is None:
        cands = [c for c in (1024, 512, 256, 128) if out_pad % c == 0]
        fitting = [c for c in cands if est_vmem(c) <= budget]
        if fitting:
            # Prefer >= 2 out-tiles so both v7x TensorCores get work.
            multi = [c for c in fitting if out_pad // c >= 2]
            tn = multi[0] if multi else fitting[0]
        else:
            tn = 128  # TODO(synk): add batch tiling when even tn=128 overflows.

    vmem_limit = int(min(budget, max(est_vmem(tn) * 3 // 2, 16 * 1024 * 1024)))

    # --- operand prep (padding is exact: padded rows/cols contribute zero) ---
    x_c = x.astype(cdt)
    x_p = jnp.pad(x_c, ((0, b_pad - B), (0, in_pad - in_f)))
    w_p = jnp.pad(fused_weight.astype(cdt),
                  ((0, out_pad - out_f), (0, in_pad - in_f)))

    # top_k_weights stays f32 (mask threshold & scaling must match reference),
    # pre-masked so inactive rows are exactly zero inside the kernel.
    tkw = top_k_weights.astype(jnp.float32)
    wmask = jnp.where(jnp.abs(tkw) > 1e-6, tkw, 0.0)               # (B, n_fused)
    wmask_p = jnp.pad(wmask.T, ((0, 0), (0, b_pad - B)))[:, :, None]
    active = jnp.any(jnp.abs(tkw) > 1e-6, axis=0).astype(jnp.int32)

    # Down-projection is tiny (B x rank per adapter): compute once here instead
    # of per out-tile in the kernel; same op order / dtypes as the reference.
    inter = jnp.einsum('bi,nri->nbr', x_c, qa_weights.astype(cdt),
                       preferred_element_type=jnp.float32).astype(cdt)
    inter_p = jnp.pad(inter, ((0, 0), (0, b_pad - B), (0, 0)))

    qb_p = jnp.pad(qb_weights.astype(cdt),
                   ((0, 0), (0, out_pad - out_f), (0, 0)))

    kernel = _make_fused_linear_kernel(n_fused, rank,
                                       approx_recip=(cdt != jnp.float32))

    out_padded = pl.pallas_call(
        kernel,
        out_shape=jax.ShapeDtypeStruct((b_pad, out_pad), jnp.float32),
        grid_spec=pltpu.PrefetchScalarGridSpec(
            num_scalar_prefetch=1,
            grid=(out_pad // tn,),
            in_specs=[
                pl.BlockSpec((b_pad, in_pad), lambda j, act: (0, 0)),        # x
                pl.BlockSpec((tn, in_pad), lambda j, act: (j, 0)),           # W
                pl.BlockSpec((n_fused, b_pad, 1), lambda j, act: (0, 0, 0)),      # wmask
                pl.BlockSpec((n_fused, b_pad, rank), lambda j, act: (0, 0, 0)),   # inter
                pl.BlockSpec((n_fused, tn, rank), lambda j, act: (0, j, 0)),      # qb
            ],
            out_specs=pl.BlockSpec((b_pad, tn), lambda j, act: (0, j)),
        ),
        compiler_params=pltpu.CompilerParams(
            dimension_semantics=("parallel",),
            vmem_limit_bytes=vmem_limit,
        ),
    )(active, x_p, w_p, wmask_p, inter_p, qb_p)

    return out_padded[:B, :out_f]


def fused_linear_reference(x, fused_weight, qa_weights, qb_weights, top_k_weights):
    """Pure-JAX reference mirroring the PyTorch forward (first-call semantics)."""
    out = x @ fused_weight.T
    adapter = jnp.zeros_like(out)
    n_fused = qa_weights.shape[0]
    for i in range(n_fused):
        w_col = top_k_weights[:, i:i + 1]
        mask = (jnp.abs(w_col) > 1e-6).astype(jnp.float32)
        lora = (x @ qa_weights[i].T) @ qb_weights[i].T * w_col
        out_norm = jnp.sqrt(jnp.sum(mask * out * out, axis=0, keepdims=True))
        lora_norm = jnp.sqrt(jnp.sum(mask * lora * lora, axis=0,
                                     keepdims=True)) + 1e-8
        adapter = adapter + mask * (0.1 * lora * (out_norm / lora_norm))
    return out + adapter


if __name__ == "__main__":
    # Small shapes consistent with the module.
    B, in_features, out_features, rank, n_fused = 8, 32, 32, 8, 4

    key = jax.random.PRNGKey(0)
    kx, kw, ka, kb, kt = jax.random.split(key, 5)

    x = jax.random.normal(kx, (B, in_features), dtype=jnp.float32)
    fused_weight = jax.random.normal(kw, (out_features, in_features),
                                     dtype=jnp.float32) * (1.0 / in_features ** 0.5)
    qa_weights = jax.random.normal(ka, (n_fused, rank, in_features),
                                   dtype=jnp.float32) * 0.02
    qb_weights = jax.random.normal(kb, (n_fused, out_features, rank),
                                   dtype=jnp.float32) * 0.02
    top_k_weights = jax.random.normal(kt, (B, n_fused), dtype=jnp.float32)
    # Zero some entries so the per-adapter active masks / skip path are exercised.
    top_k_weights = top_k_weights.at[0:3, 1].set(0.0)
    top_k_weights = top_k_weights.at[:, 2].set(0.0)   # adapter 2 fully inactive
    top_k_weights = top_k_weights.at[5, 0].set(0.0)

    ref = fused_linear_reference(x, fused_weight, qa_weights, qb_weights,
                                 top_k_weights)

    # Strict-precision path (f32 compute) — must match the reference tightly.
    out_f32 = fused_linear_forward(x, fused_weight, qa_weights, qb_weights,
                                   top_k_weights, compute_dtype=jnp.float32)
    out_f32 = jax.block_until_ready(out_f32)
    assert out_f32.shape == (B, out_features)
    assert jnp.allclose(out_f32, ref, rtol=1e-5, atol=1e-5), (
        f"f32 max abs diff {jnp.max(jnp.abs(out_f32 - ref))}")

    # Performance path (bf16 operands, f32 accumulation) — looser tolerance.
    out_bf16 = fused_linear_forward(x, fused_weight, qa_weights, qb_weights,
                                    top_k_weights, compute_dtype=jnp.bfloat16)
    out_bf16 = jax.block_until_ready(out_bf16)
    assert out_bf16.shape == (B, out_features)
    assert jnp.max(jnp.abs(out_bf16 - ref)) < 0.1, (
        f"bf16 max abs diff {jnp.max(jnp.abs(out_bf16 - ref))}")

    print("KERNEL_OK")
</pallas_src>

<mosaic_0001>
module attributes {stable_mosaic.version = 11 : i64} {
  func.func @kernel(%arg0: i32, %arg1: memref<4xi32, #tpu.memory_space<smem>>, %arg2: memref<16x128xf32, #tpu.memory_space<vmem>>, %arg3: memref<128x128xf32, #tpu.memory_space<vmem>>, %arg4: memref<4x16x1xf32, #tpu.memory_space<vmem>>, %arg5: memref<4x16x8xf32, #tpu.memory_space<vmem>>, %arg6: memref<4x128x8xf32, #tpu.memory_space<vmem>>, %arg7: memref<16x128xf32, #tpu.memory_space<vmem>>) attributes {dimension_semantics = [#tpu.dimension_semantics<parallel>], iteration_bounds = array<i64: 1>, scalar_prefetch = 1 : i64, scratch_operands = 0 : i64, tpu.core_type = #tpu.core_type<tc>, window_params = [{pipeline_mode = #tpu.pipeline_mode<synchronous>, transform_indices = @transform_0, window_bounds = array<i64: 16, 128>}, {transform_indices = @transform_1, window_bounds = array<i64: 128, 128>}, {pipeline_mode = #tpu.pipeline_mode<synchronous>, transform_indices = @transform_2, window_bounds = array<i64: 4, 16, 1>}, {pipeline_mode = #tpu.pipeline_mode<synchronous>, transform_indices = @transform_3, window_bounds = array<i64: 4, 16, 8>}, {transform_indices = @transform_4, window_bounds = array<i64: 4, 128, 8>}, {transform_indices = @transform_5, window_bounds = array<i64: 16, 128>}]} {
    %c0 = arith.constant 0 : index
    %c0_0 = arith.constant 0 : index
    %0 = vector.load %arg2[%c0, %c0_0] : memref<16x128xf32, #tpu.memory_space<vmem>>, vector<16x128xf32>
    %c0_1 = arith.constant 0 : index
    %c0_2 = arith.constant 0 : index
    %1 = vector.load %arg3[%c0_1, %c0_2] : memref<128x128xf32, #tpu.memory_space<vmem>>, vector<128x128xf32>
    %cst = arith.constant dense<0.000000e+00> : vector<16x128xf32>
    %2 = tpu.matmul %0, %1, %cst {dimension_numbers = #tpu.dot_dimension_numbers<[1], [1], [0], [0], [0, 0, 1, 0], [], []>} : vector<16x128xf32>, vector<128x128xf32>, vector<16x128xf32> -> vector<16x128xf32>
    %c0_3 = arith.constant 0 : index
    %c0_4 = arith.constant 0 : index
    %3 = vector.load %arg7[%c0_3, %c0_4] : memref<16x128xf32, #tpu.memory_space<vmem>>, vector<16x128xf32>
    tpu.vector_store %arg7[%c0_3, %c0_4], %2 {strides = array<i32>} : memref<16x128xf32, #tpu.memory_space<vmem>>, vector<16x128xf32>,
    %4 = arith.mulf %2, %2 : vector<16x128xf32>
    %c0_5 = arith.constant 0 : index
    %5 = memref.load %arg1[%c0_5] : memref<4xi32, #tpu.memory_space<smem>>
    %c0_i32 = arith.constant 0 : i32
    %6 = arith.cmpi ne, %5, %c0_i32 : i32
    %7 = arith.extui %6 : i1 to i32
    %c0_i32_6 = arith.constant 0 : i32
    %8 = arith.cmpi ne, %7, %c0_i32_6 : i32
    scf.if %8 {
      %c0_13 = arith.constant 0 : index
      %c0_14 = arith.constant 0 : index
      %c0_15 = arith.constant 0 : index
      %21 = vector.load %arg4[%c0_13, %c0_14, %c0_15] : memref<4x16x1xf32, #tpu.memory_space<vmem>>, vector<1x16x1xf32>
      %22 = vector.shape_cast %21 : vector<1x16x1xf32> to vector<16x1xf32>
      %c0_16 = arith.constant 0 : index
      %c0_17 = arith.constant 0 : index
      %c0_18 = arith.constant 0 : index
      %23 = vector.load %arg5[%c0_16, %c0_17, %c0_18] : memref<4x16x8xf32, #tpu.memory_space<vmem>>, vector<1x16x8xf32>
      %24 = vector.shape_cast %23 : vector<1x16x8xf32> to vector<16x8xf32>
      %c0_19 = arith.constant 0 : index
      %c0_20 = arith.constant 0 : index
      %c0_21 = arith.constant 0 : index
      %25 = vector.load %arg6[%c0_19, %c0_20, %c0_21] : memref<4x128x8xf32, #tpu.memory_space<vmem>>, vector<1x128x8xf32>
      %26 = vector.shape_cast %25 : vector<1x128x8xf32> to vector<128x8xf32>
      %cst_22 = arith.constant dense<0.000000e+00> : vector<16x128xf32>
      %27 = tpu.matmul %24, %26, %cst_22 {dimension_numbers = #tpu.dot_dimension_numbers<[1], [1], [0], [0], [0, 0, 1, 0], [], []>} : vector<16x8xf32>, vector<128x8xf32>, vector<16x128xf32> -> vector<16x128xf32>
      %28 = vector.broadcast %22 : vector<16x1xf32> to vector<16x128xf32>
      %29 = arith.mulf %27, %28 : vector<16x128xf32>
      %cst_23 = arith.constant 0.000000e+00 : f32
      %30 = vector.broadcast %cst_23 : f32 to vector<16x1xf32>
      %31 = arith.cmpf one, %22, %30 : vector<16x1xf32>
      %cst_24 = arith.constant 0.000000e+00 : f32
      %32 = vector.shape_cast %31 : vector<16x1xi1> to vector<16x1xi1>
      %33 = vector.broadcast %32 : vector<16x1xi1> to vector<16x128xi1>
      %34 = vector.broadcast %cst_24 : f32 to vector<16x128xf32>
      %35 = arith.select %33, %4, %34 : vector<16x128xi1>, vector<16x128xf32>
      %cst_25 = arith.constant dense<0.000000e+00> : vector<128xf32>
      %36 = vector.multi_reduction <add>, %35, %cst_25 [0] : vector<16x128xf32> to vector<128xf32>
      %37 = vector.shape_cast %36 : vector<128xf32> to vector<1x128xf32>
      %38 = math.sqrt %37 : vector<1x128xf32>
      %39 = arith.mulf %29, %29 : vector<16x128xf32>
      %cst_26 = arith.constant dense<0.000000e+00> : vector<128xf32>
      %40 = vector.multi_reduction <add>, %39, %cst_26 [0] : vector<16x128xf32> to vector<128xf32>
      %41 = vector.shape_cast %40 : vector<128xf32> to vector<1x128xf32>
      %42 = math.sqrt %41 : vector<1x128xf32>
      %cst_27 = arith.constant 9.99999993E-9 : f32
      %43 = vector.broadcast %cst_27 : f32 to vector<1x128xf32>
      %44 = arith.addf %42, %43 : vector<1x128xf32>
      %cst_28 = arith.constant 1.000000e-01 : f32
      %45 = vector.broadcast %cst_28 : f32 to vector<1x128xf32>
      %46 = arith.mulf %45, %38 : vector<1x128xf32>
      %47 = arith.divf %46, %44 : vector<1x128xf32>
      %c0_29 = arith.constant 0 : index
      %c0_30 = arith.constant 0 : index
      %48 = vector.load %arg7[%c0_29, %c0_30] : memref<16x128xf32, #tpu.memory_space<vmem>>, vector<16x128xf32>
      %49 = vector.broadcast %47 : vector<1x128xf32> to vector<16x128xf32>
      %50 = arith.mulf %29, %49 : vector<16x128xf32>
      %51 = arith.addf %48, %50 : vector<16x128xf32>
      %c0_31 = arith.constant 0 : index
      %c0_32 = arith.constant 0 : index
      %52 = vector.load %arg7[%c0_31, %c0_32] : memref<16x128xf32, #tpu.memory_space<vmem>>, vector<16x128xf32>
      tpu.vector_store %arg7[%c0_31, %c0_32], %51 {strides = array<i32>} : memref<16x128xf32, #tpu.memory_space<vmem>>, vector<16x128xf32>,
    } else {
    }
    %c1 = arith.constant 1 : index
    %9 = memref.load %arg1[%c1] : memref<4xi32, #tpu.memory_space<smem>>
    %c0_i32_7 = arith.constant 0 : i32
    %10 = arith.cmpi ne, %9, %c0_i32_7 : i32
    %11 = arith.extui %10 : i1 to i32
    %c0_i32_8 = arith.constant 0 : i32
    %12 = arith.cmpi ne, %11, %c0_i32_8 : i32
    scf.if %12 {
      %c1_13 = arith.constant 1 : index
      %c0_14 = arith.constant 0 : index
      %c0_15 = arith.constant 0 : index
      %21 = vector.load %arg4[%c1_13, %c0_14, %c0_15] : memref<4x16x1xf32, #tpu.memory_space<vmem>>, vector<1x16x1xf32>
      %22 = vector.shape_cast %21 : vector<1x16x1xf32> to vector<16x1xf32>
      %c1_16 = arith.constant 1 : index
      %c0_17 = arith.constant 0 : index
      %c0_18 = arith.constant 0 : index
      %23 = vector.load %arg5[%c1_16, %c0_17, %c0_18] : memref<4x16x8xf32, #tpu.memory_space<vmem>>, vector<1x16x8xf32>
      %24 = vector.shape_cast %23 : vector<1x16x8xf32> to vector<16x8xf32>
      %c1_19 = arith.constant 1 : index
      %c0_20 = arith.constant 0 : index
      %c0_21 = arith.constant 0 : index
      %25 = vector.load %arg6[%c1_19, %c0_20, %c0_21] : memref<4x128x8xf32, #tpu.memory_space<vmem>>, vector<1x128x8xf32>
      %26 = vector.shape_cast %25 : vector<1x128x8xf32> to vector<128x8xf32>
      %cst_22 = arith.constant dense<0.000000e+00> : vector<16x128xf32>
      %27 = tpu.matmul %24, %26, %cst_22 {dimension_numbers = #tpu.dot_dimension_numbers<[1], [1], [0], [0], [0, 0, 1, 0], [], []>} : vector<16x8xf32>, vector<128x8xf32>, vector<16x128xf32> -> vector<16x128xf32>
      %28 = vector.broadcast %22 : vector<16x1xf32> to vector<16x128xf32>
      %29 = arith.mulf %27, %28 : vector<16x128xf32>
      %cst_23 = arith.constant 0.000000e+00 : f32
      %30 = vector.broadcast %cst_23 : f32 to vector<16x1xf32>
      %31 = arith.cmpf one, %22, %30 : vector<16x1xf32>
      %cst_24 = arith.constant 0.000000e+00 : f32
      %32 = vector.shape_cast %31 : vector<16x1xi1> to vector<16x1xi1>
      %33 = vector.broadcast %32 : vector<16x1xi1> to vector<16x128xi1>
      %34 = vector.broadcast %cst_24 : f32 to vector<16x128xf32>
      %35 = arith.select %33, %4, %34 : vector<16x128xi1>, vector<16x128xf32>
      %cst_25 = arith.constant dense<0.000000e+00> : vector<128xf32>
      %36 = vector.multi_reduction <add>, %35, %cst_25 [0] : vector<16x128xf32> to vector<128xf32>
      %37 = vector.shape_cast %36 : vector<128xf32> to vector<1x128xf32>
      %38 = math.sqrt %37 : vector<1x128xf32>
      %39 = arith.mulf %29, %29 : vector<16x128xf32>
      %cst_26 = arith.constant dense<0.000000e+00> : vector<128xf32>
      %40 = vector.multi_reduction <add>, %39, %cst_26 [0] : vector<16x128xf32> to vector<128xf32>
      %41 = vector.shape_cast %40 : vector<128xf32> to vector<1x128xf32>
      %42 = math.sqrt %41 : vector<1x128xf32>
      %cst_27 = arith.constant 9.99999993E-9 : f32
      %43 = vector.broadcast %cst_27 : f32 to vector<1x128xf32>
      %44 = arith.addf %42, %43 : vector<1x128xf32>
      %cst_28 = arith.constant 1.000000e-01 : f32
      %45 = vector.broadcast %cst_28 : f32 to vector<1x128xf32>
      %46 = arith.mulf %45, %38 : vector<1x128xf32>
      %47 = arith.divf %46, %44 : vector<1x128xf32>
      %c0_29 = arith.constant 0 : index
      %c0_30 = arith.constant 0 : index
      %48 = vector.load %arg7[%c0_29, %c0_30] : memref<16x128xf32, #tpu.memory_space<vmem>>, vector<16x128xf32>
      %49 = vector.broadcast %47 : vector<1x128xf32> to vector<16x128xf32>
      %50 = arith.mulf %29, %49 : vector<16x128xf32>
      %51 = arith.addf %48, %50 : vector<16x128xf32>
      %c0_31 = arith.constant 0 : index
      %c0_32 = arith.constant 0 : index
      %52 = vector.load %arg7[%c0_31, %c0_32] : memref<16x128xf32, #tpu.memory_space<vmem>>, vector<16x128xf32>
      tpu.vector_store %arg7[%c0_31, %c0_32], %51 {strides = array<i32>} : memref<16x128xf32, #tpu.memory_space<vmem>>, vector<16x128xf32>,
    } else {
    }
    %c2 = arith.constant 2 : index
    %13 = memref.load %arg1[%c2] : memref<4xi32, #tpu.memory_space<smem>>
    %c0_i32_9 = arith.constant 0 : i32
    %14 = arith.cmpi ne, %13, %c0_i32_9 : i32
    %15 = arith.extui %14 : i1 to i32
    %c0_i32_10 = arith.constant 0 : i32
    %16 = arith.cmpi ne, %15, %c0_i32_10 : i32
    scf.if %16 {
      %c2_13 = arith.constant 2 : index
      %c0_14 = arith.constant 0 : index
      %c0_15 = arith.constant 0 : index
      %21 = vector.load %arg4[%c2_13, %c0_14, %c0_15] : memref<4x16x1xf32, #tpu.memory_space<vmem>>, vector<1x16x1xf32>
      %22 = vector.shape_cast %21 : vector<1x16x1xf32> to vector<16x1xf32>
      %c2_16 = arith.constant 2 : index
      %c0_17 = arith.constant 0 : index
      %c0_18 = arith.constant 0 : index
      %23 = vector.load %arg5[%c2_16, %c0_17, %c0_18] : memref<4x16x8xf32, #tpu.memory_space<vmem>>, vector<1x16x8xf32>
      %24 = vector.shape_cast %23 : vector<1x16x8xf32> to vector<16x8xf32>
      %c2_19 = arith.constant 2 : index
      %c0_20 = arith.constant 0 : index
      %c0_21 = arith.constant 0 : index
      %25 = vector.load %arg6[%c2_19, %c0_20, %c0_21] : memref<4x128x8xf32, #tpu.memory_space<vmem>>, vector<1x128x8xf32>
      %26 = vector.shape_cast %25 : vector<1x128x8xf32> to vector<128x8xf32>
      %cst_22 = arith.constant dense<0.000000e+00> : vector<16x128xf32>
      %27 = tpu.matmul %24, %26, %cst_22 {dimension_numbers = #tpu.dot_dimension_numbers<[1], [1], [0], [0], [0, 0, 1, 0], [], []>} : vector<16x8xf32>, vector<128x8xf32>, vector<16x128xf32> -> vector<16x128xf32>
      %28 = vector.broadcast %22 : vector<16x1xf32> to vector<16x128xf32>
      %29 = arith.mulf %27, %28 : vector<16x128xf32>
      %cst_23 = arith.constant 0.000000e+00 : f32
      %30 = vector.broadcast %cst_23 : f32 to vector<16x1xf32>
      %31 = arith.cmpf one, %22, %30 : vector<16x1xf32>
      %cst_24 = arith.constant 0.000000e+00 : f32
      %32 = vector.shape_cast %31 : vector<16x1xi1> to vector<16x1xi1>
      %33 = vector.broadcast %32 : vector<16x1xi1> to vector<16x128xi1>
      %34 = vector.broadcast %cst_24 : f32 to vector<16x128xf32>
      %35 = arith.select %33, %4, %34 : vector<16x128xi1>, vector<16x128xf32>
      %cst_25 = arith.constant dense<0.000000e+00> : vector<128xf32>
      %36 = vector.multi_reduction <add>, %35, %cst_25 [0] : vector<16x128xf32> to vector<128xf32>
      %37 = vector.shape_cast %36 : vector<128xf32> to vector<1x128xf32>
      %38 = math.sqrt %37 : vector<1x128xf32>
      %39 = arith.mulf %29, %29 : vector<16x128xf32>
      %cst_26 = arith.constant dense<0.000000e+00> : vector<128xf32>
      %40 = vector.multi_reduction <add>, %39, %cst_26 [0] : vector<16x128xf32> to vector<128xf32>
      %41 = vector.shape_cast %40 : vector<128xf32> to vector<1x128xf32>
      %42 = math.sqrt %41 : vector<1x128xf32>
      %cst_27 = arith.constant 9.99999993E-9 : f32
      %43 = vector.broadcast %cst_27 : f32 to vector<1x128xf32>
      %44 = arith.addf %42, %43 : vector<1x128xf32>
      %cst_28 = arith.constant 1.000000e-01 : f32
      %45 = vector.broadcast %cst_28 : f32 to vector<1x128xf32>
      %46 = arith.mulf %45, %38 : vector<1x128xf32>
      %47 = arith.divf %46, %44 : vector<1x128xf32>
      %c0_29 = arith.constant 0 : index
      %c0_30 = arith.constant 0 : index
      %48 = vector.load %arg7[%c0_29, %c0_30] : memref<16x128xf32, #tpu.memory_space<vmem>>, vector<16x128xf32>
      %49 = vector.broadcast %47 : vector<1x128xf32> to vector<16x128xf32>
      %50 = arith.mulf %29, %49 : vector<16x128xf32>
      %51 = arith.addf %48, %50 : vector<16x128xf32>
      %c0_31 = arith.constant 0 : index
      %c0_32 = arith.constant 0 : index
      %52 = vector.load %arg7[%c0_31, %c0_32] : memref<16x128xf32, #tpu.memory_space<vmem>>, vector<16x128xf32>
      tpu.vector_store %arg7[%c0_31, %c0_32], %51 {strides = array<i32>} : memref<16x128xf32, #tpu.memory_space<vmem>>, vector<16x128xf32>,
    } else {
    }
    %c3 = arith.constant 3 : index
    %17 = memref.load %arg1[%c3] : memref<4xi32, #tpu.memory_space<smem>>
    %c0_i32_11 = arith.constant 0 : i32
    %18 = arith.cmpi ne, %17, %c0_i32_11 : i32
    %19 = arith.extui %18 : i1 to i32
    %c0_i32_12 = arith.constant 0 : i32
    %20 = arith.cmpi ne, %19, %c0_i32_12 : i32
    scf.if %20 {
      %c3_13 = arith.constant 3 : index
      %c0_14 = arith.constant 0 : index
      %c0_15 = arith.constant 0 : index
      %21 = vector.load %arg4[%c3_13, %c0_14, %c0_15] : memref<4x16x1xf32, #tpu.memory_space<vmem>>, vector<1x16x1xf32>
      %22 = vector.shape_cast %21 : vector<1x16x1xf32> to vector<16x1xf32>
      %c3_16 = arith.constant 3 : index
      %c0_17 = arith.constant 0 : index
      %c0_18 = arith.constant 0 : index
      %23 = vector.load %arg5[%c3_16, %c0_17, %c0_18] : memref<4x16x8xf32, #tpu.memory_space<vmem>>, vector<1x16x8xf32>
      %24 = vector.shape_cast %23 : vector<1x16x8xf32> to vector<16x8xf32>
      %c3_19 = arith.constant 3 : index
      %c0_20 = arith.constant 0 : index
      %c0_21 = arith.constant 0 : index
      %25 = vector.load %arg6[%c3_19, %c0_20, %c0_21] : memref<4x128x8xf32, #tpu.memory_space<vmem>>, vector<1x128x8xf32>
      %26 = vector.shape_cast %25 : vector<1x128x8xf32> to vector<128x8xf32>
      %cst_22 = arith.constant dense<0.000000e+00> : vector<16x128xf32>
      %27 = tpu.matmul %24, %26, %cst_22 {dimension_numbers = #tpu.dot_dimension_numbers<[1], [1], [0], [0], [0, 0, 1, 0], [], []>} : vector<16x8xf32>, vector<128x8xf32>, vector<16x128xf32> -> vector<16x128xf32>
      %28 = vector.broadcast %22 : vector<16x1xf32> to vector<16x128xf32>
      %29 = arith.mulf %27, %28 : vector<16x128xf32>
      %cst_23 = arith.constant 0.000000e+00 : f32
      %30 = vector.broadcast %cst_23 : f32 to vector<16x1xf32>
      %31 = arith.cmpf one, %22, %30 : vector<16x1xf32>
      %cst_24 = arith.constant 0.000000e+00 : f32
      %32 = vector.shape_cast %31 : vector<16x1xi1> to vector<16x1xi1>
      %33 = vector.broadcast %32 : vector<16x1xi1> to vector<16x128xi1>
      %34 = vector.broadcast %cst_24 : f32 to vector<16x128xf32>
      %35 = arith.select %33, %4, %34 : vector<16x128xi1>, vector<16x128xf32>
      %cst_25 = arith.constant dense<0.000000e+00> : vector<128xf32>
      %36 = vector.multi_reduction <add>, %35, %cst_25 [0] : vector<16x128xf32> to vector<128xf32>
      %37 = vector.shape_cast %36 : vector<128xf32> to vector<1x128xf32>
      %38 = math.sqrt %37 : vector<1x128xf32>
      %39 = arith.mulf %29, %29 : vector<16x128xf32>
      %cst_26 = arith.constant dense<0.000000e+00> : vector<128xf32>
      %40 = vector.multi_reduction <add>, %39, %cst_26 [0] : vector<16x128xf32> to vector<128xf32>
      %41 = vector.shape_cast %40 : vector<128xf32> to vector<1x128xf32>
      %42 = math.sqrt %41 : vector<1x128xf32>
      %cst_27 = arith.constant 9.99999993E-9 : f32
      %43 = vector.broadcast %cst_27 : f32 to vector<1x128xf32>
      %44 = arith.addf %42, %43 : vector<1x128xf32>
      %cst_28 = arith.constant 1.000000e-01 : f32
      %45 = vector.broadcast %cst_28 : f32 to vector<1x128xf32>
      %46 = arith.mulf %45, %38 : vector<1x128xf32>
      %47 = arith.divf %46, %44 : vector<1x128xf32>
      %c0_29 = arith.constant 0 : index
      %c0_30 = arith.constant 0 : index
      %48 = vector.load %arg7[%c0_29, %c0_30] : memref<16x128xf32, #tpu.memory_space<vmem>>, vector<16x128xf32>
      %49 = vector.broadcast %47 : vector<1x128xf32> to vector<16x128xf32>
      %50 = arith.mulf %29, %49 : vector<16x128xf32>
      %51 = arith.addf %48, %50 : vector<16x128xf32>
      %c0_31 = arith.constant 0 : index
      %c0_32 = arith.constant 0 : index
      %52 = vector.load %arg7[%c0_31, %c0_32] : memref<16x128xf32, #tpu.memory_space<vmem>>, vector<16x128xf32>
      tpu.vector_store %arg7[%c0_31, %c0_32], %51 {strides = array<i32>} : memref<16x128xf32, #tpu.memory_space<vmem>>, vector<16x128xf32>,
    } else {
    }
    return
  }
  func.func @transform_0(%arg0: i32, %arg1: memref<4xi32, #tpu.memory_space<smem>>) -> (i32, i32) {
    %c0_i32 = arith.constant 0 : i32
    %c0_i32_0 = arith.constant 0 : i32
    %c0_i32_1 = arith.constant 0 : i32
    return %c0_i32, %c0_i32_0 : i32, i32
  }
  func.func @transform_1(%arg0: i32, %arg1: memref<4xi32, #tpu.memory_space<smem>>) -> (i32, i32) {
    %c0_i32 = arith.constant 0 : i32
    %c0_i32_0 = arith.constant 0 : i32
    return %arg0, %c0_i32 : i32, i32
  }
  func.func @transform_2(%arg0: i32, %arg1: memref<4xi32, #tpu.memory_space<smem>>) -> (i32, i32, i32) {
    %c0_i32 = arith.constant 0 : i32
    %c0_i32_0 = arith.constant 0 : i32
    %c0_i32_1 = arith.constant 0 : i32
    %c0_i32_2 = arith.constant 0 : i32
    return %c0_i32, %c0_i32_0, %c0_i32_1 : i32, i32, i32
  }
  func.func @transform_3(%arg0: i32, %arg1: memref<4xi32, #tpu.memory_space<smem>>) -> (i32, i32, i32) {
    %c0_i32 = arith.constant 0 : i32
    %c0_i32_0 = arith.constant 0 : i32
    %c0_i32_1 = arith.constant 0 : i32
    %c0_i32_2 = arith.constant 0 : i32
    return %c0_i32, %c0_i32_0, %c0_i32_1 : i32, i32, i32
  }
  func.func @transform_4(%arg0: i32, %arg1: memref<4xi32, #tpu.memory_space<smem>>) -> (i32, i32, i32) {
    %c0_i32 = arith.constant 0 : i32
    %c0_i32_0 = arith.constant 0 : i32
    %c0_i32_1 = arith.constant 0 : i32
    return %c0_i32, %arg0, %c0_i32_0 : i32, i32, i32
  }
  func.func @transform_5(%arg0: i32, %arg1: memref<4xi32, #tpu.memory_space<smem>>) -> (i32, i32) {
    %c0_i32 = arith.constant 0 : i32
    %c0_i32_0 = arith.constant 0 : i32
    return %c0_i32, %arg0 : i32, i32
  }
}

</mosaic_0001>

<llo_original>
// kernel: tpu_custom_call.1
$region0: #{tpu_custom_call.1}
  #allocation0 [shape = 'u32[]', space=smem, size = 0x4, offset = 0x4, fixed_abs, tag = 'smem constant byte address 0x4 - core index']
  #allocation1 [shape = 'u32[72,128]{1,0:T(1,128)}', space=vmem, size = 0x9000, scoped, tag = 'internal scratch']
  #allocation2 [shape = 's32[1]{0}', space=sflag, size = 0x4, scoped, tag = 'scoped memory for tpu_custom_call.1']
  #allocation3 [shape = 'u8[512]{0}', space=smem, size = 0x200, scoped, tag = 'prefetched SMEM operand 0']
  %s0 = inlined_call_operand.vmem [shape: s32[4], index: 0, kind: input, shape index: {}]
  %s1 = inlined_call_operand.vmem [shape: f32[16,128], index: 1, kind: input, shape index: {}]
  %s2 = inlined_call_operand.vmem [shape: f32[128,128], index: 2, kind: input, shape index: {}]
  %s3 = inlined_call_operand.vmem [shape: f32[4,16,1], index: 3, kind: input, shape index: {}]
  %s4 = inlined_call_operand.vmem [shape: f32[4,16,8], index: 4, kind: input, shape index: {}]
  %s5 = inlined_call_operand.vmem [shape: f32[4,128,8], index: 5, kind: input, shape index: {}]
  %s6 = inlined_call_operand.hbm [shape: f32[16,128], index: 6, kind: output, shape index: {}]
  %s7 = sld [smem:[#allocation0]]
  $region46: #{tpu_custom_call.1} parent=0
    _
  %s9 = ssub.s32 1, %s7
  %s10 = scalar_select 0, %s9, %s7
  %s12 = sshll.u32 %s0, 4
  %s13 = int_to_ptr.vmem [resolvable:$true] %s12
  %15 = dma.vmem_to_smem %s13, 16, [#allocation3], [#allocation2]
  %17 = dma.done [#allocation2], 16
  %18 = sfence
  $region1: #{tpu_custom_call.1} parent=0
    #allocation4 [shape = 'u8[8192]{0}', space=vmem, size = 0x2000, scoped, tag = 'output window, operand 0, single buffered']
    #allocation5 [shape = 's32[1]{0}', space=sflag, size = 0x4, scoped, tag = 'scoped memory for tpu_custom_call.1']
    %19 = vsyncpa [#allocation5], 0
    // Predicated region
    $region2: #{tpu_custom_call.1} parent=1 // pred_check
      _
    $region3: #{tpu_custom_call.1} parent=1 // pred_check_branch
      %21 = sbr.rel (0) target = $region5
    $region4: #{tpu_custom_call.1} parent=1 // pred_region
      _
    $region5: #{tpu_custom_call.1} parent=1 // pred_fallthru
      _
    // Predicated region
    $region6: #{tpu_custom_call.1} parent=1 // pred_check
      _
    $region7: #{tpu_custom_call.1} parent=1 // pred_check_branch
      %23 = sbr.rel (0) target = $region9
    $region8: #{tpu_custom_call.1} parent=1 // pred_region
      _
    $region9: #{tpu_custom_call.1} parent=1 // pred_fallthru
      _
    // Predicated region
    $region10: #{tpu_custom_call.1} parent=1 // pred_check
      _
    $region11: #{tpu_custom_call.1} parent=1 // pred_check_branch
      %25 = sbr.rel (0) target = $region13
    $region12: #{tpu_custom_call.1} parent=1 // pred_region
      _
    $region13: #{tpu_custom_call.1} parent=1 // pred_fallthru
      _
    // Predicated region
    $region14: #{tpu_custom_call.1} parent=1 // pred_check
      _
    $region15: #{tpu_custom_call.1} parent=1 // pred_check_branch
      %27 = sbr.rel (0) target = $region17
    $region16: #{tpu_custom_call.1} parent=1 // pred_region
      _
    $region17: #{tpu_custom_call.1} parent=1 // pred_fallthru
      _
    // Predicated region
    $region18: #{tpu_custom_call.1} parent=1 // pred_check
      _
    $region19: #{tpu_custom_call.1} parent=1 // pred_check_branch
      %29 = sbr.rel (0) target = $region21
    $region20: #{tpu_custom_call.1} parent=1 // pred_region
      _
    $region21: #{tpu_custom_call.1} parent=1 // pred_fallthru
      _
    %v30 = vld [vmem:[%s1] sm:$0xff]
    %v31 = vld [vmem:[%s1 + $0x8] sm:$0xff]
    %v32 = vld [vmem:[%s2] sm:$0xff]
    %v33 = vld [vmem:[%s2 + $0x8] sm:$0xff]
    %v34 = vld [vmem:[%s2 + $0x10] sm:$0xff]
    %v35 = vld [vmem:[%s2 + $0x18] sm:$0xff]
    %v36 = vld [vmem:[%s2 + $0x20] sm:$0xff]
    %v37 = vld [vmem:[%s2 + $0x28] sm:$0xff]
    %v38 = vld [vmem:[%s2 + $0x30] sm:$0xff]
    %v39 = vld [vmem:[%s2 + $0x38] sm:$0xff]
    %v40 = vld [vmem:[%s2 + $0x40] sm:$0xff]
    %v41 = vld [vmem:[%s2 + $0x48] sm:$0xff]
    %v42 = vld [vmem:[%s2 + $0x50] sm:$0xff]
    %v43 = vld [vmem:[%s2 + $0x58] sm:$0xff]
    %v44 = vld [vmem:[%s2 + $0x60] sm:$0xff]
    %v45 = vld [vmem:[%s2 + $0x68] sm:$0xff]
    %v46 = vld [vmem:[%s2 + $0x70] sm:$0xff]
    %v47 = vld [vmem:[%s2 + $0x78] sm:$0xff]
    %48 = vmatpush.xpose.msra.mxu0 %v47
    %49 = vmatpush.xpose.msra.mxu0 %v46
    %50 = vmatpush.xpose.msra.mxu0 %v45
    %51 = vmatpush.xpose.msra.mxu0 %v44
    %52 = vmatpush.xpose.msra.mxu0 %v43
    %53 = vmatpush.xpose.msra.mxu0 %v42
    %54 = vmatpush.xpose.msra.mxu0 %v41
    %55 = vmatpush.xpose.msra.mxu0 %v40
    %56 = vmatpush.xpose.msra.mxu0 %v39
    %57 = vmatpush.xpose.msra.mxu0 %v38
    %58 = vmatpush.xpose.msra.mxu0 %v37
    %59 = vmatpush.xpose.msra.mxu0 %v36
    %60 = vmatpush.xpose.msra.mxu0 %v35
    %61 = vmatpush.xpose.msra.mxu0 %v34
    %62 = vmatpush.xpose.msra.mxu0 %v33
    %63 = vmatpush.xpose.msra.mxu0 %v32
    %64 = vmatmul.f32.gmra.mxu0 %v30
    %v65 = vpop.f32.mrf.mxu0
    %v66 = vadd.f32 0.0, %v65
    %67 = vmatmul.f32.gmra.mxu0 %v31
    %v68 = vpop.f32.mrf.mxu0
    %v69 = vadd.f32 0.0, %v68
    %70 = vdwg.mxu0
    %71 = vst [vmem:[#allocation4] sm:$0xff] %v66
    %72 = vst [vmem:[#allocation4 + $0x8] sm:$0xff] %v69
    %v73 = vmul.f32 %v66, %v66
    %v74 = vmul.f32 %v69, %v69
    %s75 = sld [smem:[#allocation3]]
    %p76 = scmp.ne.s32.totalorder %s75, 0
    // Predicated region
    $region22: #{tpu_custom_call.1} parent=1 // pred_check
      %p77 = pneg %p76
    $region23: #{tpu_custom_call.1} parent=1 // pred_check_branch
      %79 = sbr.rel (%p77) target = $region25
    $region24: #{tpu_custom_call.1} parent=1 // pred_region
      %v80 = vld [vmem:[%s3] sm:$0xff]
      %v81 = vld [vmem:[%s3 + $0x8] sm:$0xff]
      %v82 = vld [vmem:[%s4] sm:$0xff]
      %v83 = vld [vmem:[%s4 + $0x8] sm:$0xff]
      %v84 = vld [vmem:[%s5] sm:$0xff]
      %v85 = vld [vmem:[%s5 + $0x8] sm:$0xff]
      %v86 = vld [vmem:[%s5 + $0x10] sm:$0xff]
      %v87 = vld [vmem:[%s5 + $0x18] sm:$0xff]
      %v88 = vld [vmem:[%s5 + $0x20] sm:$0xff]
      %v89 = vld [vmem:[%s5 + $0x28] sm:$0xff]
      %v90 = vld [vmem:[%s5 + $0x30] sm:$0xff]
      %v91 = vld [vmem:[%s5 + $0x38] sm:$0xff]
      %v92 = vld [vmem:[%s5 + $0x40] sm:$0xff]
      %v93 = vld [vmem:[%s5 + $0x48] sm:$0xff]
      %v94 = vld [vmem:[%s5 + $0x50] sm:$0xff]
      %v95 = vld [vmem:[%s5 + $0x58] sm:$0xff]
      %v96 = vld [vmem:[%s5 + $0x60] sm:$0xff]
      %v97 = vld [vmem:[%s5 + $0x68] sm:$0xff]
      %v98 = vld [vmem:[%s5 + $0x70] sm:$0xff]
      %v99 = vld [vmem:[%s5 + $0x78] sm:$0xff]
      %vm100 = vcmask 64512
      %v102 = vsel %vm100, %v82, 0
      %v105 = vsel %vm100, %v83, 0
      %v108 = vsel %vm100, %v84, 0
      %v111 = vsel %vm100, %v85, 0
      %v114 = vsel %vm100, %v86, 0
      %v117 = vsel %vm100, %v87, 0
      %v120 = vsel %vm100, %v88, 0
      %v123 = vsel %vm100, %v89, 0
      %v126 = vsel %vm100, %v90, 0
      %v129 = vsel %vm100, %v91, 0
      %v132 = vsel %vm100, %v92, 0
      %v135 = vsel %vm100, %v93, 0
      %v138 = vsel %vm100, %v94, 0
      %v141 = vsel %vm100, %v95, 0
      %v144 = vsel %vm100, %v96, 0
      %v147 = vsel %vm100, %v97, 0
      %v150 = vsel %vm100, %v98, 0
      %v153 = vsel %vm100, %v99, 0
      %155 = vmatpush.xpose.msra.mxu0 %v153
      %156 = vmatpush.xpose.msra.mxu0 %v150
      %157 = vmatpush.xpose.msra.mxu0 %v147
      %158 = vmatpush.xpose.msra.mxu0 %v144
      %159 = vmatpush.xpose.msra.mxu0 %v141
      %160 = vmatpush.xpose.msra.mxu0 %v138
      %161 = vmatpush.xpose.msra.mxu0 %v135
      %162 = vmatpush.xpose.msra.mxu0 %v132
      %163 = vmatpush.xpose.msra.mxu0 %v129
      %164 = vmatpush.xpose.msra.mxu0 %v126
      %165 = vmatpush.xpose.msra.mxu0 %v123
      %166 = vmatpush.xpose.msra.mxu0 %v120
      %167 = vmatpush.xpose.msra.mxu0 %v117
      %168 = vmatpush.xpose.msra.mxu0 %v114
      %169 = vmatpush.xpose.msra.mxu0 %v111
      %170 = vmatpush.xpose.msra.mxu0 %v108
      %171 = vmatmul.f32.gmra.mxu0 %v102
      %v172 = vpop.f32.mrf.mxu0
      %v173 = vadd.f32 0.0, %v172
      %174 = vmatmul.f32.gmra.mxu0 %v105
      %v175 = vpop.f32.mrf.mxu0
      %v176 = vadd.f32 0.0, %v175
      %177 = vdwg.mxu0
      %179 = vset.pattern.permute.xlu0 0
      %180 = vperm.xlu0 %179, %v80
      %v181 = vpop.permute.xlu0 %180
      %184 = vset.pattern.permute.xlu0 0
      %185 = vperm.xlu0 %184, %v81
      %v186 = vpop.permute.xlu0 %185
      %v188 = vmul.f32 %v173, %v181
      %v189 = vmul.f32 %v176, %v186
      %vm190 = vcmp.ne.f32.partialorder %v80, 0.0
      %vm191 = vcmp.ne.f32.partialorder %v81, 0.0
      %v192 = vsel %vm190, 1, 0
      %v193 = vsel %vm191, 1, 0
      %194 = vset.pattern.permute.xlu0 0
      %195 = vperm.xlu0 %194, %v192
      %v196 = vpop.permute.xlu0 %195
      %197 = vset.pattern.permute.xlu0 0
      %198 = vperm.xlu0 %197, %v193
      %v199 = vpop.permute.xlu0 %198
      %vm200 = vcmp.eq.s32.totalorder %v196, 1
      %vm201 = vcmp.eq.s32.totalorder %v199, 1
      %v202 = vsel %vm200, %v73, 0.0
      %v203 = vsel %vm201, %v74, 0.0
      %v204 = vadd.f32 %v202, %v203
      %v205 = vrot.slane %v204, 4
      %v206 = vadd.f32 %v204, %v205
      %v207 = vrot.slane %v206, 2
      %v208 = vadd.f32 %v206, %v207
      %v209 = vrot.slane %v208, 1
      %v210 = vadd.f32 %v208, %v209
      %v211 = vrsqrt.pop %v210
      %v212 = vmul.f32 %v211, %v210
      %v213 = vmul.f32 %v212, %v211
      %v214 = vmul.f32 0.5, %v213
      %v215 = vsub.f32 1.5, %v214
      %v216 = vmul.f32 %v211, %v215
      %v217 = vmul.f32 %v210, %v216
      %vm218 = vcmp.eq.f32.partialorder %v210, inf
      %v219 = vsel %vm218, %v210, %v217
      %vm220 = vcmp.eq.f32.partialorder %v210, 0.0
      %v221 = vand.u32 %v210, 2147483648
      %v222 = vsel %vm220, %v221, %v219
      %v223 = vmul.f32 %v188, %v188
      %v224 = vmul.f32 %v189, %v189
      %v225 = vadd.f32 %v223, %v224
      %v226 = vrot.slane %v225, 4
      %v227 = vadd.f32 %v225, %v226
      %v228 = vrot.slane %v227, 2
      %v229 = vadd.f32 %v227, %v228
      %v230 = vrot.slane %v229, 1
      %v231 = vadd.f32 %v229, %v230
      %v232 = vrsqrt.pop %v231
      %v233 = vmul.f32 %v232, %v231
      %v234 = vmul.f32 %v233, %v232
      %v235 = vmul.f32 0.5, %v234
      %v236 = vsub.f32 1.5, %v235
      %v237 = vmul.f32 %v232, %v236
      %v238 = vmul.f32 %v231, %v237
      %vm239 = vcmp.eq.f32.partialorder %v231, inf
      %v240 = vsel %vm239, %v231, %v238
      %vm241 = vcmp.eq.f32.partialorder %v231, 0.0
      %v242 = vand.u32 %v231, 2147483648
      %v243 = vsel %vm241, %v242, %v240
      %v244 = vadd.f32 %v243, 1e-08
      %v245 = vmul.f32 %v222, 0.1
      %v246 = vrcp.pop %v244
      %v247 = vmul.f32 %v244, %v246
      %v248 = vsub.f32 1.0, %v247
      %v249 = vmul.f32 %v246, %v248
      %v250 = vadd.f32 %v246, %v249
      %vm251 = vweird.f32 %v244
      %vm252 = vweird.f32 %v246
      %vm253 = vmor %vm251, %vm252
      %v254 = vsel %vm253, %v246, %v250
      %v255 = vand.u32 2147483647, %v244
      %vm256 = vcmp.eq.f32.partialorder %v255, 8.507059e+37
      %v257 = vand.u32 %v244, 2147483648
      %v258 = vor.u32 1.1754944e-38, %v257
      %v259 = vsel %vm256, %v258, %v254
      %v260 = vmul.f32 %v245, %v259
      %v261 = vld [vmem:[#allocation4] sm:$0xff]
      %v262 = vld [vmem:[#allocation4 + $0x8] sm:$0xff]
      %v263 = vmul.f32 %v188, %v260
      %v264 = vmul.f32 %v189, %v260
      %v265 = vadd.f32 %v261, %v263
      %v266 = vadd.f32 %v262, %v264
      %267 = vst [vmem:[#allocation4] sm:$0xff] %v265
      %268 = vst [vmem:[#allocation4 + $0x8] sm:$0xff] %v266
    $region25: #{tpu_custom_call.1} parent=1 // pred_fallthru
      _
    %s269 = sld [smem:[#allocation3 + $0x1]]
    %p270 = scmp.ne.s32.totalorder %s269, 0
    // Predicated region
    $region26: #{tpu_custom_call.1} parent=1 // pred_check
      %p271 = pneg %p270
    $region27: #{tpu_custom_call.1} parent=1 // pred_check_branch
      %273 = sbr.rel (%p271) target = $region29
    $region28: #{tpu_custom_call.1} parent=1 // pred_region
      %s274 = scalar_lea.vmem %s3, 16
      %v275 = vld [vmem:[%s274] sm:$0xff]
      %v276 = vld [vmem:[%s274 + $0x8] sm:$0xff]
      %s277 = scalar_lea.vmem %s4, 16
      %v278 = vld [vmem:[%s277] sm:$0xff]
      %v279 = vld [vmem:[%s277 + $0x8] sm:$0xff]
      %s280 = scalar_lea.vmem %s5, 128
      %v281 = vld [vmem:[%s280] sm:$0xff]
      %v282 = vld [vmem:[%s280 + $0x8] sm:$0xff]
      %v283 = vld [vmem:[%s280 + $0x10] sm:$0xff]
      %v284 = vld [vmem:[%s280 + $0x18] sm:$0xff]
      %v285 = vld [vmem:[%s280 + $0x20] sm:$0xff]
      %v286 = vld [vmem:[%s280 + $0x28] sm:$0xff]
      %v287 = vld [vmem:[%s280 + $0x30] sm:$0xff]
      %v288 = vld [vmem:[%s280 + $0x38] sm:$0xff]
      %v289 = vld [vmem:[%s280 + $0x40] sm:$0xff]
      %v290 = vld [vmem:[%s280 + $0x48] sm:$0xff]
      %v291 = vld [vmem:[%s280 + $0x50] sm:$0xff]
      %v292 = vld [vmem:[%s280 + $0x58] sm:$0xff]
      %v293 = vld [vmem:[%s280 + $0x60] sm:$0xff]
      %v294 = vld [vmem:[%s280 + $0x68] sm:$0xff]
      %v295 = vld [vmem:[%s280 + $0x70] sm:$0xff]
      %v296 = vld [vmem:[%s280 + $0x78] sm:$0xff]
      %vm297 = vcmask 64512
      %v299 = vsel %vm297, %v278, 0
      %v302 = vsel %vm297, %v279, 0
      %v305 = vsel %vm297, %v281, 0
      %v308 = vsel %vm297, %v282, 0
      %v311 = vsel %vm297, %v283, 0
      %v314 = vsel %vm297, %v284, 0
      %v317 = vsel %vm297, %v285, 0
      %v320 = vsel %vm297, %v286, 0
      %v323 = vsel %vm297, %v287, 0
      %v326 = vsel %vm297, %v288, 0
      %v329 = vsel %vm297, %v289, 0
      %v332 = vsel %vm297, %v290, 0
      %v335 = vsel %vm297, %v291, 0
      %v338 = vsel %vm297, %v292, 0
      %v341 = vsel %vm297, %v293, 0
      %v344 = vsel %vm297, %v294, 0
      %v347 = vsel %vm297, %v295, 0
      %v350 = vsel %vm297, %v296, 0
      %352 = vmatpush.xpose.msra.mxu0 %v350
      %353 = vmatpush.xpose.msra.mxu0 %v347
      %354 = vmatpush.xpose.msra.mxu0 %v344
      %355 = vmatpush.xpose.msra.mxu0 %v341
      %356 = vmatpush.xpose.msra.mxu0 %v338
      %357 = vmatpush.xpose.msra.mxu0 %v335
      %358 = vmatpush.xpose.msra.mxu0 %v332
      %359 = vmatpush.xpose.msra.mxu0 %v329
      %360 = vmatpush.xpose.msra.mxu0 %v326
      %361 = vmatpush.xpose.msra.mxu0 %v323
      %362 = vmatpush.xpose.msra.mxu0 %v320
      %363 = vmatpush.xpose.msra.mxu0 %v317
      %364 = vmatpush.xpose.msra.mxu0 %v314
      %365 = vmatpush.xpose.msra.mxu0 %v311
      %366 = vmatpush.xpose.msra.mxu0 %v308
      %367 = vmatpush.xpose.msra.mxu0 %v305
      %368 = vmatmul.f32.gmra.mxu0 %v299
      %v369 = vpop.f32.mrf.mxu0
      %v370 = vadd.f32 0.0, %v369
      %371 = vmatmul.f32.gmra.mxu0 %v302
      %v372 = vpop.f32.mrf.mxu0
      %v373 = vadd.f32 0.0, %v372
      %374 = vdwg.mxu0
      %376 = vset.pattern.permute.xlu0 0
      %377 = vperm.xlu0 %376, %v275
      %v378 = vpop.permute.xlu0 %377
      %381 = vset.pattern.permute.xlu0 0
      %382 = vperm.xlu0 %381, %v276
      %v383 = vpop.permute.xlu0 %382
      %v385 = vmul.f32 %v370, %v378
      %v386 = vmul.f32 %v373, %v383
      %vm387 = vcmp.ne.f32.partialorder %v275, 0.0
      %vm388 = vcmp.ne.f32.partialorder %v276, 0.0
      %v389 = vsel %vm387, 1, 0
      %v390 = vsel %vm388, 1, 0
      %391 = vset.pattern.permute.xlu0 0
      %392 = vperm.xlu0 %391, %v389
      %v393 = vpop.permute.xlu0 %392
      %394 = vset.pattern.permute.xlu0 0
      %395 = vperm.xlu0 %394, %v390
      %v396 = vpop.permute.xlu0 %395
      %vm397 = vcmp.eq.s32.totalorder %v393, 1
      %vm398 = vcmp.eq.s32.totalorder %v396, 1
      %v399 = vsel %vm397, %v73, 0.0
      %v400 = vsel %vm398, %v74, 0.0
      %v401 = vadd.f32 %v399, %v400
      %v402 = vrot.slane %v401, 4
      %v403 = vadd.f32 %v401, %v402
      %v404 = vrot.slane %v403, 2
      %v405 = vadd.f32 %v403, %v404
      %v406 = vrot.slane %v405, 1
      %v407 = vadd.f32 %v405, %v406
      %v408 = vrsqrt.pop %v407
      %v409 = vmul.f32 %v408, %v407
      %v410 = vmul.f32 %v409, %v408
      %v411 = vmul.f32 0.5, %v410
      %v412 = vsub.f32 1.5, %v411
      %v413 = vmul.f32 %v408, %v412
      %v414 = vmul.f32 %v407, %v413
      %vm415 = vcmp.eq.f32.partialorder %v407, inf
      %v416 = vsel %vm415, %v407, %v414
      %vm417 = vcmp.eq.f32.partialorder %v407, 0.0
      %v418 = vand.u32 %v407, 2147483648
      %v419 = vsel %vm417, %v418, %v416
      %v420 = vmul.f32 %v385, %v385
      %v421 = vmul.f32 %v386, %v386
      %v422 = vadd.f32 %v420, %v421
      %v423 = vrot.slane %v422, 4
      %v424 = vadd.f32 %v422, %v423
      %v425 = vrot.slane %v424, 2
      %v426 = vadd.f32 %v424, %v425
      %v427 = vrot.slane %v426, 1
      %v428 = vadd.f32 %v426, %v427
      %v429 = vrsqrt.pop %v428
      %v430 = vmul.f32 %v429, %v428
      %v431 = vmul.f32 %v430, %v429
      %v432 = vmul.f32 0.5, %v431
      %v433 = vsub.f32 1.5, %v432
      %v434 = vmul.f32 %v429, %v433
      %v435 = vmul.f32 %v428, %v434
      %vm436 = vcmp.eq.f32.partialorder %v428, inf
      %v437 = vsel %vm436, %v428, %v435
      %vm438 = vcmp.eq.f32.partialorder %v428, 0.0
      %v439 = vand.u32 %v428, 2147483648
      %v440 = vsel %vm438, %v439, %v437
      %v441 = vadd.f32 %v440, 1e-08
      %v442 = vmul.f32 %v419, 0.1
      %v443 = vrcp.pop %v441
      %v444 = vmul.f32 %v441, %v443
      %v445 = vsub.f32 1.0, %v444
      %v446 = vmul.f32 %v443, %v445
      %v447 = vadd.f32 %v443, %v446
      %vm448 = vweird.f32 %v441
      %vm449 = vweird.f32 %v443
      %vm450 = vmor %vm448, %vm449
      %v451 = vsel %vm450, %v443, %v447
      %v452 = vand.u32 2147483647, %v441
      %vm453 = vcmp.eq.f32.partialorder %v452, 8.507059e+37
      %v454 = vand.u32 %v441, 2147483648
      %v455 = vor.u32 1.1754944e-38, %v454
      %v456 = vsel %vm453, %v455, %v451
      %v457 = vmul.f32 %v442, %v456
      %v458 = vld [vmem:[#allocation4] sm:$0xff]
      %v459 = vld [vmem:[#allocation4 + $0x8] sm:$0xff]
      %v460 = vmul.f32 %v385, %v457
      %v461 = vmul.f32 %v386, %v457
      %v462 = vadd.f32 %v458, %v460
      %v463 = vadd.f32 %v459, %v461
      %464 = vst [vmem:[#allocation4] sm:$0xff] %v462
      %465 = vst [vmem:[#allocation4 + $0x8] sm:$0xff] %v463
    $region29: #{tpu_custom_call.1} parent=1 // pred_fallthru
      _
    %s466 = sld [smem:[#allocation3 + $0x2]]
    %p467 = scmp.ne.s32.totalorder %s466, 0
    // Predicated region
    $region30: #{tpu_custom_call.1} parent=1 // pred_check
      %p468 = pneg %p467
    $region31: #{tpu_custom_call.1} parent=1 // pred_check_branch
      %470 = sbr.rel (%p468) target = $region33
    $region32: #{tpu_custom_call.1} parent=1 // pred_region
      %s471 = scalar_lea.vmem %s3, 32
      %v472 = vld [vmem:[%s471] sm:$0xff]
      %v473 = vld [vmem:[%s471 + $0x8] sm:$0xff]
      %s474 = scalar_lea.vmem %s4, 32
      %v475 = vld [vmem:[%s474] sm:$0xff]
      %v476 = vld [vmem:[%s474 + $0x8] sm:$0xff]
      %s477 = scalar_lea.vmem %s5, 256
      %v478 = vld [vmem:[%s477] sm:$0xff]
      %v479 = vld [vmem:[%s477 + $0x8] sm:$0xff]
      %v480 = vld [vmem:[%s477 + $0x10] sm:$0xff]
      %v481 = vld [vmem:[%s477 + $0x18] sm:$0xff]
      %v482 = vld [vmem:[%s477 + $0x20] sm:$0xff]
      %v483 = vld [vmem:[%s477 + $0x28] sm:$0xff]
      %v484 = vld [vmem:[%s477 + $0x30] sm:$0xff]
      %v485 = vld [vmem:[%s477 + $0x38] sm:$0xff]
      %v486 = vld [vmem:[%s477 + $0x40] sm:$0xff]
      %v487 = vld [vmem:[%s477 + $0x48] sm:$0xff]
      %v488 = vld [vmem:[%s477 + $0x50] sm:$0xff]
      %v489 = vld [vmem:[%s477 + $0x58] sm:$0xff]
      %v490 = vld [vmem:[%s477 + $0x60] sm:$0xff]
      %v491 = vld [vmem:[%s477 + $0x68] sm:$0xff]
      %v492 = vld [vmem:[%s477 + $0x70] sm:$0xff]
      %v493 = vld [vmem:[%s477 + $0x78] sm:$0xff]
      %vm494 = vcmask 64512
      %v496 = vsel %vm494, %v475, 0
      %v499 = vsel %vm494, %v476, 0
      %v502 = vsel %vm494, %v478, 0
      %v505 = vsel %vm494, %v479, 0
      %v508 = vsel %vm494, %v480, 0
      %v511 = vsel %vm494, %v481, 0
      %v514 = vsel %vm494, %v482, 0
      %v517 = vsel %vm494, %v483, 0
      %v520 = vsel %vm494, %v484, 0
      %v523 = vsel %vm494, %v485, 0
      %v526 = vsel %vm494, %v486, 0
      %v529 = vsel %vm494, %v487, 0
      %v532 = vsel %vm494, %v488, 0
      %v535 = vsel %vm494, %v489, 0
      %v538 = vsel %vm494, %v490, 0
      %v541 = vsel %vm494, %v491, 0
      %v544 = vsel %vm494, %v492, 0
      %v547 = vsel %vm494, %v493, 0
      %549 = vmatpush.xpose.msra.mxu0 %v547
      %550 = vmatpush.xpose.msra.mxu0 %v544
      %551 = vmatpush.xpose.msra.mxu0 %v541
      %552 = vmatpush.xpose.msra.mxu0 %v538
      %553 = vmatpush.xpose.msra.mxu0 %v535
      %554 = vmatpush.xpose.msra.mxu0 %v532
      %555 = vmatpush.xpose.msra.mxu0 %v529
      %556 = vmatpush.xpose.msra.mxu0 %v526
      %557 = vmatpush.xpose.msra.mxu0 %v523
      %558 = vmatpush.xpose.msra.mxu0 %v520
      %559 = vmatpush.xpose.msra.mxu0 %v517
      %560 = vmatpush.xpose.msra.mxu0 %v514
      %561 = vmatpush.xpose.msra.mxu0 %v511
      %562 = vmatpush.xpose.msra.mxu0 %v508
      %563 = vmatpush.xpose.msra.mxu0 %v505
      %564 = vmatpush.xpose.msra.mxu0 %v502
      %565 = vmatmul.f32.gmra.mxu0 %v496
      %v566 = vpop.f32.mrf.mxu0
      %v567 = vadd.f32 0.0, %v566
      %568 = vmatmul.f32.gmra.mxu0 %v499
      %v569 = vpop.f32.mrf.mxu0
      %v570 = vadd.f32 0.0, %v569
      %571 = vdwg.mxu0
      %573 = vset.pattern.permute.xlu0 0
      %574 = vperm.xlu0 %573, %v472
      %v575 = vpop.permute.xlu0 %574
      %578 = vset.pattern.permute.xlu0 0
      %579 = vperm.xlu0 %578, %v473
      %v580 = vpop.permute.xlu0 %579
      %v582 = vmul.f32 %v567, %v575
      %v583 = vmul.f32 %v570, %v580
      %vm584 = vcmp.ne.f32.partialorder %v472, 0.0
      %vm585 = vcmp.ne.f32.partialorder %v473, 0.0
      %v586 = vsel %vm584, 1, 0
      %v587 = vsel %vm585, 1, 0
      %588 = vset.pattern.permute.xlu0 0
      %589 = vperm.xlu0 %588, %v586
      %v590 = vpop.permute.xlu0 %589
      %591 = vset.pattern.permute.xlu0 0
      %592 = vperm.xlu0 %591, %v587
      %v593 = vpop.permute.xlu0 %592
      %vm594 = vcmp.eq.s32.totalorder %v590, 1
      %vm595 = vcmp.eq.s32.totalorder %v593, 1
      %v596 = vsel %vm594, %v73, 0.0
      %v597 = vsel %vm595, %v74, 0.0
      %v598 = vadd.f32 %v596, %v597
      %v599 = vrot.slane %v598, 4
      %v600 = vadd.f32 %v598, %v599
      %v601 = vrot.slane %v600, 2
      %v602 = vadd.f32 %v600, %v601
      %v603 = vrot.slane %v602, 1
      %v604 = vadd.f32 %v602, %v603
      %v605 = vrsqrt.pop %v604
      %v606 = vmul.f32 %v605, %v604
      %v607 = vmul.f32 %v606, %v605
      %v608 = vmul.f32 0.5, %v607
      %v609 = vsub.f32 1.5, %v608
      %v610 = vmul.f32 %v605, %v609
      %v611 = vmul.f32 %v604, %v610
      %vm612 = vcmp.eq.f32.partialorder %v604, inf
      %v613 = vsel %vm612, %v604, %v611
      %vm614 = vcmp.eq.f32.partialorder %v604, 0.0
      %v615 = vand.u32 %v604, 2147483648
      %v616 = vsel %vm614, %v615, %v613
      %v617 = vmul.f32 %v582, %v582
      %v618 = vmul.f32 %v583, %v583
      %v619 = vadd.f32 %v617, %v618
      %v620 = vrot.slane %v619, 4
      %v621 = vadd.f32 %v619, %v620
      %v622 = vrot.slane %v621, 2
      %v623 = vadd.f32 %v621, %v622
      %v624 = vrot.slane %v623, 1
      %v625 = vadd.f32 %v623, %v624
      %v626 = vrsqrt.pop %v625
      %v627 = vmul.f32 %v626, %v625
      %v628 = vmul.f32 %v627, %v626
      %v629 = vmul.f32 0.5, %v628
      %v630 = vsub.f32 1.5, %v629
      %v631 = vmul.f32 %v626, %v630
      %v632 = vmul.f32 %v625, %v631
      %vm633 = vcmp.eq.f32.partialorder %v625, inf
      %v634 = vsel %vm633, %v625, %v632
      %vm635 = vcmp.eq.f32.partialorder %v625, 0.0
      %v636 = vand.u32 %v625, 2147483648
      %v637 = vsel %vm635, %v636, %v634
      %v638 = vadd.f32 %v637, 1e-08
      %v639 = vmul.f32 %v616, 0.1
      %v640 = vrcp.pop %v638
      %v641 = vmul.f32 %v638, %v640
      %v642 = vsub.f32 1.0, %v641
      %v643 = vmul.f32 %v640, %v642
      %v644 = vadd.f32 %v640, %v643
      %vm645 = vweird.f32 %v638
      %vm646 = vweird.f32 %v640
      %vm647 = vmor %vm645, %vm646
      %v648 = vsel %vm647, %v640, %v644
      %v649 = vand.u32 2147483647, %v638
      %vm650 = vcmp.eq.f32.partialorder %v649, 8.507059e+37
      %v651 = vand.u32 %v638, 2147483648
      %v652 = vor.u32 1.1754944e-38, %v651
      %v653 = vsel %vm650, %v652, %v648
      %v654 = vmul.f32 %v639, %v653
      %v655 = vld [vmem:[#allocation4] sm:$0xff]
      %v656 = vld [vmem:[#allocation4 + $0x8] sm:$0xff]
      %v657 = vmul.f32 %v582, %v654
      %v658 = vmul.f32 %v583, %v654
      %v659 = vadd.f32 %v655, %v657
      %v660 = vadd.f32 %v656, %v658
      %661 = vst [vmem:[#allocation4] sm:$0xff] %v659
      %662 = vst [vmem:[#allocation4 + $0x8] sm:$0xff] %v660
    $region33: #{tpu_custom_call.1} parent=1 // pred_fallthru
      _
    %s663 = sld [smem:[#allocation3 + $0x3]]
    %p664 = scmp.ne.s32.totalorder %s663, 0
    // Predicated region
    $region34: #{tpu_custom_call.1} parent=1 // pred_check
      %p665 = pneg %p664
    $region35: #{tpu_custom_call.1} parent=1 // pred_check_branch
      %667 = sbr.rel (%p665) target = $region37
    $region36: #{tpu_custom_call.1} parent=1 // pred_region
      %s668 = scalar_lea.vmem %s3, 48
      %v669 = vld [vmem:[%s668] sm:$0xff]
      %v670 = vld [vmem:[%s668 + $0x8] sm:$0xff]
      %s671 = scalar_lea.vmem %s4, 48
      %v672 = vld [vmem:[%s671] sm:$0xff]
      %v673 = vld [vmem:[%s671 + $0x8] sm:$0xff]
      %s674 = scalar_lea.vmem %s5, 384
      %v675 = vld [vmem:[%s674] sm:$0xff]
      %v676 = vld [vmem:[%s674 + $0x8] sm:$0xff]
      %v677 = vld [vmem:[%s674 + $0x10] sm:$0xff]
      %v678 = vld [vmem:[%s674 + $0x18] sm:$0xff]
      %v679 = vld [vmem:[%s674 + $0x20] sm:$0xff]
      %v680 = vld [vmem:[%s674 + $0x28] sm:$0xff]
      %v681 = vld [vmem:[%s674 + $0x30] sm:$0xff]
      %v682 = vld [vmem:[%s674 + $0x38] sm:$0xff]
      %v683 = vld [vmem:[%s674 + $0x40] sm:$0xff]
      %v684 = vld [vmem:[%s674 + $0x48] sm:$0xff]
      %v685 = vld [vmem:[%s674 + $0x50] sm:$0xff]
      %v686 = vld [vmem:[%s674 + $0x58] sm:$0xff]
      %v687 = vld [vmem:[%s674 + $0x60] sm:$0xff]
      %v688 = vld [vmem:[%s674 + $0x68] sm:$0xff]
      %v689 = vld [vmem:[%s674 + $0x70] sm:$0xff]
      %v690 = vld [vmem:[%s674 + $0x78] sm:$0xff]
      %vm691 = vcmask 64512
      %v693 = vsel %vm691, %v672, 0
      %v696 = vsel %vm691, %v673, 0
      %v699 = vsel %vm691, %v675, 0
      %v702 = vsel %vm691, %v676, 0
      %v705 = vsel %vm691, %v677, 0
      %v708 = vsel %vm691, %v678, 0
      %v711 = vsel %vm691, %v679, 0
      %v714 = vsel %vm691, %v680, 0
      %v717 = vsel %vm691, %v681, 0
      %v720 = vsel %vm691, %v682, 0
      %v723 = vsel %vm691, %v683, 0
      %v726 = vsel %vm691, %v684, 0
      %v729 = vsel %vm691, %v685, 0
      %v732 = vsel %vm691, %v686, 0
      %v735 = vsel %vm691, %v687, 0
      %v738 = vsel %vm691, %v688, 0
      %v741 = vsel %vm691, %v689, 0
      %v744 = vsel %vm691, %v690, 0
      %746 = vmatpush.xpose.msra.mxu0 %v744
      %747 = vmatpush.xpose.msra.mxu0 %v741
      %748 = vmatpush.xpose.msra.mxu0 %v738
      %749 = vmatpush.xpose.msra.mxu0 %v735
      %750 = vmatpush.xpose.msra.mxu0 %v732
      %751 = vmatpush.xpose.msra.mxu0 %v729
      %752 = vmatpush.xpose.msra.mxu0 %v726
      %753 = vmatpush.xpose.msra.mxu0 %v723
      %754 = vmatpush.xpose.msra.mxu0 %v720
      %755 = vmatpush.xpose.msra.mxu0 %v717
      %756 = vmatpush.xpose.msra.mxu0 %v714
      %757 = vmatpush.xpose.msra.mxu0 %v711
      %758 = vmatpush.xpose.msra.mxu0 %v708
      %759 = vmatpush.xpose.msra.mxu0 %v705
      %760 = vmatpush.xpose.msra.mxu0 %v702
      %761 = vmatpush.xpose.msra.mxu0 %v699
      %762 = vmatmul.f32.gmra.mxu0 %v693
      %v763 = vpop.f32.mrf.mxu0
      %v764 = vadd.f32 0.0, %v763
      %765 = vmatmul.f32.gmra.mxu0 %v696
      %v766 = vpop.f32.mrf.mxu0
      %v767 = vadd.f32 0.0, %v766
      %768 = vdwg.mxu0
      %770 = vset.pattern.permute.xlu0 0
      %771 = vperm.xlu0 %770, %v669
      %v772 = vpop.permute.xlu0 %771
      %775 = vset.pattern.permute.xlu0 0
      %776 = vperm.xlu0 %775, %v670
      %v777 = vpop.permute.xlu0 %776
      %v779 = vmul.f32 %v764, %v772
      %v780 = vmul.f32 %v767, %v777
      %vm781 = vcmp.ne.f32.partialorder %v669, 0.0
      %vm782 = vcmp.ne.f32.partialorder %v670, 0.0
      %v783 = vsel %vm781, 1, 0
      %v784 = vsel %vm782, 1, 0
      %785 = vset.pattern.permute.xlu0 0
      %786 = vperm.xlu0 %785, %v783
      %v787 = vpop.permute.xlu0 %786
      %788 = vset.pattern.permute.xlu0 0
      %789 = vperm.xlu0 %788, %v784
      %v790 = vpop.permute.xlu0 %789
      %vm791 = vcmp.eq.s32.totalorder %v787, 1
      %vm792 = vcmp.eq.s32.totalorder %v790, 1
      %v793 = vsel %vm791, %v73, 0.0
      %v794 = vsel %vm792, %v74, 0.0
      %v795 = vadd.f32 %v793, %v794
      %v796 = vrot.slane %v795, 4
      %v797 = vadd.f32 %v795, %v796
      %v798 = vrot.slane %v797, 2
      %v799 = vadd.f32 %v797, %v798
      %v800 = vrot.slane %v799, 1
      %v801 = vadd.f32 %v799, %v800
      %v802 = vrsqrt.pop %v801
      %v803 = vmul.f32 %v802, %v801
      %v804 = vmul.f32 %v803, %v802
      %v805 = vmul.f32 0.5, %v804
      %v806 = vsub.f32 1.5, %v805
      %v807 = vmul.f32 %v802, %v806
      %v808 = vmul.f32 %v801, %v807
      %vm809 = vcmp.eq.f32.partialorder %v801, inf
      %v810 = vsel %vm809, %v801, %v808
      %vm811 = vcmp.eq.f32.partialorder %v801, 0.0
      %v812 = vand.u32 %v801, 2147483648
      %v813 = vsel %vm811, %v812, %v810
      %v814 = vmul.f32 %v779, %v779
      %v815 = vmul.f32 %v780, %v780
      %v816 = vadd.f32 %v814, %v815
      %v817 = vrot.slane %v816, 4
      %v818 = vadd.f32 %v816, %v817
      %v819 = vrot.slane %v818, 2
      %v820 = vadd.f32 %v818, %v819
      %v821 = vrot.slane %v820, 1
      %v822 = vadd.f32 %v820, %v821
      %v823 = vrsqrt.pop %v822
      %v824 = vmul.f32 %v823, %v822
      %v825 = vmul.f32 %v824, %v823
      %v826 = vmul.f32 0.5, %v825
      %v827 = vsub.f32 1.5, %v826
      %v828 = vmul.f32 %v823, %v827
      %v829 = vmul.f32 %v822, %v828
      %vm830 = vcmp.eq.f32.partialorder %v822, inf
      %v831 = vsel %vm830, %v822, %v829
      %vm832 = vcmp.eq.f32.partialorder %v822, 0.0
      %v833 = vand.u32 %v822, 2147483648
      %v834 = vsel %vm832, %v833, %v831
      %v835 = vadd.f32 %v834, 1e-08
      %v836 = vmul.f32 %v813, 0.1
      %v837 = vrcp.pop %v835
      %v838 = vmul.f32 %v835, %v837
      %v839 = vsub.f32 1.0, %v838
      %v840 = vmul.f32 %v837, %v839
      %v841 = vadd.f32 %v837, %v840
      %vm842 = vweird.f32 %v835
      %vm843 = vweird.f32 %v837
      %vm844 = vmor %vm842, %vm843
      %v845 = vsel %vm844, %v837, %v841
      %v846 = vand.u32 2147483647, %v835
      %vm847 = vcmp.eq.f32.partialorder %v846, 8.507059e+37
      %v848 = vand.u32 %v835, 2147483648
      %v849 = vor.u32 1.1754944e-38, %v848
      %v850 = vsel %vm847, %v849, %v845
      %v851 = vmul.f32 %v836, %v850
      %v852 = vld [vmem:[#allocation4] sm:$0xff]
      %v853 = vld [vmem:[#allocation4 + $0x8] sm:$0xff]
      %v854 = vmul.f32 %v779, %v851
      %v855 = vmul.f32 %v780, %v851
      %v856 = vadd.f32 %v852, %v854
      %v857 = vadd.f32 %v853, %v855
      %858 = vst [vmem:[#allocation4] sm:$0xff] %v856
      %859 = vst [vmem:[#allocation4 + $0x8] sm:$0xff] %v857
    $region37: #{tpu_custom_call.1} parent=1 // pred_fallthru
      _
    // Predicated region
    $region38: #{tpu_custom_call.1} parent=1 // pred_check
      _
    $region39: #{tpu_custom_call.1} parent=1 // pred_check_branch
      %861 = sbr.rel (0) target = $region41
    $region40: #{tpu_custom_call.1} parent=1 // pred_region
      %863 = vsyncadd [#allocation5], 0
      %s864 = sshll.u32 [#allocation4], 4
      %s865 = int_to_ptr.vmem [resolvable:$true] %s864
      %s866 = sshll.u32 %s6, 4
      %s867 = int_to_ptr.hbm [resolvable:$true] %s866
      %872 = dma.vmem_to_hbm [thread:$0]  %s865, 256, %s867, [#allocation5], 128, 128, 8
    $region41: #{tpu_custom_call.1} parent=1 // pred_fallthru
      _
    // Predicated region
    $region42: #{tpu_custom_call.1} parent=1 // pred_check
      _
    $region43: #{tpu_custom_call.1} parent=1 // pred_check_branch
      %874 = sbr.rel (0) target = $region45
    $region44: #{tpu_custom_call.1} parent=1 // pred_region
      %876 = dma.done [#allocation5], 256
    $region45: #{tpu_custom_call.1} parent=1 // pred_fallthru
      _
    %877 = vsyncpa [#allocation5], 1

</llo_original>
